<compile_context>
chip_gen: v5e
topology: v5e:2x2
jax: 0.10.0
libtpu: 0.0.40
codegen_flags: <defaults>
</compile_context>

<pallas_src>
import jax
import jax.numpy as jnp
from jax.experimental import pallas as pl
from jax.experimental.pallas import tpu as pltpu


# ----------------------------------------------------------------------------- #
# Kernel
# ----------------------------------------------------------------------------- #
def mpfca_kernel(x1_ref, x2_ref, w_ref, b_ref, o_ref):
    x1 = x1_ref[...]                                   # (tb, 128) lane-dense
    x2 = x2_ref[...]
    b = b_ref[...]                                     # (4, 128)

    # Stage 1 (per branch): block-diag(P copies of Wa) -> per-segment Linear+ReLU.
    h1 = jnp.maximum(
        jnp.dot(x1, w_ref[0], preferred_element_type=jnp.float32) + b[0:1, :], 0.0)
    h2 = jnp.maximum(
        jnp.dot(x2, w_ref[1], preferred_element_type=jnp.float32) + b[1:2, :], 0.0)

    # Stage 2: block-diag(column-broadcast wb) -> per-segment scalar score,
    # already broadcast across its F-lane segment.  Gate = sigmoid(score + bb).
    g1 = jax.nn.sigmoid(
        jnp.dot(h1, w_ref[2], preferred_element_type=jnp.float32) + b[2:3, :])
    g2 = jax.nn.sigmoid(
        jnp.dot(h2, w_ref[3], preferred_element_type=jnp.float32) + b[3:4, :])

    out = g1 * x1.astype(jnp.float32) + g2 * x2.astype(jnp.float32)
    o_ref[...] = out.astype(o_ref.dtype)               # full-128-lane store


# ----------------------------------------------------------------------------- #
# One-time parameter packing (call once, reuse across mpfca_pallas calls)
# ----------------------------------------------------------------------------- #
def prepare_mpfca_params(params):
    """params hold (in,out)-layout weights (PyTorch weight.T):
       w1a (F,F), b1a (1,F), w1b (F,1), b1b (1,1) and the same for net2."""
    F = params["w1a"].shape[0]
    assert 128 % F == 0, "lane-dense packing requires feature_dim to divide 128"
    P = 128 // F
    dt = params["w1a"].dtype
    eye = jnp.eye(P, dtype=dt)

    def bd(w):                       # (F,F) -> (128,128) block-diag, P copies
        return jnp.kron(eye, w.astype(dt))

    def bd_colbcast(wb):             # (F,1) -> (128,128) column-broadcast diag
        blk = jnp.broadcast_to(wb.reshape(F, 1).astype(dt), (F, F))
        return jnp.kron(eye, blk)

    w_packed = jnp.stack(
        [bd(params["w1a"]), bd(params["w2a"]),
         bd_colbcast(params["w1b"]), bd_colbcast(params["w2b"])],
        axis=0)                                                      # (4,128,128)

    b_packed = jnp.stack(
        [jnp.tile(params["b1a"].reshape(F).astype(dt), P),
         jnp.tile(params["b2a"].reshape(F).astype(dt), P),
         jnp.broadcast_to(params["b1b"].reshape(()).astype(dt), (128,)),
         jnp.broadcast_to(params["b2b"].reshape(()).astype(dt), (128,))],
        axis=0)                                                      # (4,128)

    return {"w_packed": w_packed, "b_packed": b_packed, "feature_dim": F,
            "pack": P}


# ----------------------------------------------------------------------------- #
# Tiling: big lane-dense tiles, even grid-step count, no tiny-divisor pathology
# ----------------------------------------------------------------------------- #
def _pick_tiling(bp_rows, max_block_bp=4096):
    """Return (block_bp, padded_rows, steps) over packed (128-lane) rows."""
    rup8 = lambda n: ((n + 7) // 8) * 8
    if bp_rows <= max_block_bp:
        blk = max(8, rup8(bp_rows))
        return blk, blk, 1                     # single step, full-array block
    steps = -(-bp_rows // max_block_bp)
    if steps % 2:                              # even split for v7x's 2 TCs
        steps += 1
    blk = max(8, rup8(-(-bp_rows // steps)))
    return blk, blk * steps, steps


# ----------------------------------------------------------------------------- #
# Wrapper
# ----------------------------------------------------------------------------- #
def mpfca_pallas(x1, x2, prepared, *, max_block_bp=4096):
    B, F = x1.shape
    assert x2.shape == (B, F)
    assert F == prepared["feature_dim"]
    P = prepared["pack"]                       # rows packed per 128-lane row
    w_packed = prepared["w_packed"]
    b_packed = prepared["b_packed"]

    bp_rows = -(-B // P)                       # packed rows needed
    block_bp, bp_pad, steps = _pick_tiling(bp_rows, max_block_bp)
    b_pad = bp_pad * P

    def repack(x):                             # (B,F) -> (bp_pad, 128), lane-dense
        if b_pad != B:
            x = jnp.pad(x, ((0, b_pad - B), (0, 0)))
        return x.reshape(bp_pad, 128)

    x1p = repack(x1)
    x2p = repack(x2)

    x_spec = pl.BlockSpec((block_bp, 128), lambda i: (i, 0))
    w_spec = pl.BlockSpec((4, 128, 128), lambda i: (0, 0, 0))
    b_spec = pl.BlockSpec((4, 128), lambda i: (0, 0))

    grid_spec = pltpu.PrefetchScalarGridSpec(
        num_scalar_prefetch=0,
        grid=(steps,),
        in_specs=[x_spec, x_spec, w_spec, b_spec],
        out_specs=x_spec,
    )

    x_bytes = jnp.dtype(x1.dtype).itemsize
    w_bytes = jnp.dtype(w_packed.dtype).itemsize
    # Honest, padded-layout VMEM accounting:
    #   pipeline: x1, x2, out tiles, double-buffered, 128 lanes each
    pipe = 3 * 2 * block_bp * 128 * x_bytes
    #   in-kernel f32 intermediates (h1, h2, g1, g2, casts, out) — generous budget
    interm = 6 * block_bp * 128 * 4
    #   replicated weights + biases (double-buffered by BlockSpec)
    wmem = 2 * (w_packed.size + b_packed.size) * w_bytes
    vmem_need = pipe + interm + wmem
    # Clamp so the limit stays under v7x's 64 MiB physical VMEM per TC.
    vmem_limit = int(min(max(vmem_need + (4 << 20), 32 << 20), 56 << 20))

    cost = pl.CostEstimate(
        flops=4 * 2 * bp_pad * 128 * 128,
        transcendentals=2 * bp_pad * 128,
        bytes_accessed=3 * bp_pad * 128 * x_bytes
        + (w_packed.size + b_packed.size) * w_bytes,
    )

    outp = pl.pallas_call(
        mpfca_kernel,
        out_shape=jax.ShapeDtypeStruct((bp_pad, 128), x1.dtype),
        grid_spec=grid_spec,
        compiler_params=pltpu.CompilerParams(
            dimension_semantics=("parallel",),
            vmem_limit_bytes=vmem_limit,
        ),
        cost_estimate=cost,
    )(x1p, x2p, w_packed, b_packed)

    out = outp.reshape(b_pad, F)
    if b_pad != B:
        out = out[:B]
    return out


# ----------------------------------------------------------------------------- #
# Pure-JAX reference + param init
# ----------------------------------------------------------------------------- #
def mpfca_reference(x1, x2, params):
    def net(x, wa, ba, wb, bb):
        h = jnp.maximum(x @ wa + ba, 0.0)
        return jax.nn.sigmoid(h @ wb + bb)
    a1 = net(x1, params["w1a"], params["b1a"], params["w1b"], params["b1b"])
    a2 = net(x2, params["w2a"], params["b2a"], params["w2b"], params["b2b"])
    return a1 * x1 + a2 * x2


def init_params(key, feature_dim):
    ks = jax.random.split(key, 8)
    scale = 1.0 / jnp.sqrt(feature_dim)
    u = lambda k, s: jax.random.uniform(k, s, jnp.float32, -scale, scale)
    return {
        # stored as (in, out), i.e. PyTorch weight.T
        "w1a": u(ks[0], (feature_dim, feature_dim)),
        "b1a": u(ks[1], (1, feature_dim)),
        "w1b": u(ks[2], (feature_dim, 1)),
        "b1b": u(ks[3], (1, 1)),
        "w2a": u(ks[4], (feature_dim, feature_dim)),
        "b2a": u(ks[5], (1, feature_dim)),
        "w2b": u(ks[6], (feature_dim, 1)),
        "b2b": u(ks[7], (1, 1)),
    }


if __name__ == "__main__":
    key = jax.random.PRNGKey(0)
    k1, k2, kp = jax.random.split(key, 3)

    B, F = 8, 32          # batch=8, feature_dim=32
    x1 = jax.random.normal(k1, (B, F), jnp.float32)
    x2 = jax.random.normal(k2, (B, F), jnp.float32)
    params = init_params(kp, F)

    prepared = prepare_mpfca_params(params)   # one-time packing, off hot path

    out = mpfca_pallas(x1, x2, prepared)
    out = jax.block_until_ready(out)

    ref = mpfca_reference(x1, x2, params)
    assert out.shape == (B, F)
    assert jnp.allclose(out, ref, atol=1e-5, rtol=1e-5), "mismatch vs reference"

    print("KERNEL_OK")
</pallas_src>

<mosaic_0001>
module attributes {stable_mosaic.version = 11 : i64} {
  func.func @mpfca_kernel(%arg0: i32, %arg1: memref<8x128xf32, #tpu.memory_space<vmem>>, %arg2: memref<8x128xf32, #tpu.memory_space<vmem>>, %arg3: memref<4x128x128xf32, #tpu.memory_space<vmem>>, %arg4: memref<4x128xf32, #tpu.memory_space<vmem>>, %arg5: memref<8x128xf32, #tpu.memory_space<vmem>>) attributes {dimension_semantics = [#tpu.dimension_semantics<parallel>], iteration_bounds = array<i64: 1>, scalar_prefetch = 0 : i64, scratch_operands = 0 : i64, tpu.core_type = #tpu.core_type<tc>, window_params = [{transform_indices = @transform_0, window_bounds = array<i64: 8, 128>}, {transform_indices = @transform_1, window_bounds = array<i64: 8, 128>}, {pipeline_mode = #tpu.pipeline_mode<synchronous>, transform_indices = @transform_2, window_bounds = array<i64: 4, 128, 128>}, {pipeline_mode = #tpu.pipeline_mode<synchronous>, transform_indices = @transform_3, window_bounds = array<i64: 4, 128>}, {transform_indices = @transform_4, window_bounds = array<i64: 8, 128>}]} {
    %c0 = arith.constant 0 : index
    %c0_0 = arith.constant 0 : index
    %0 = vector.load %arg1[%c0, %c0_0] : memref<8x128xf32, #tpu.memory_space<vmem>>, vector<8x128xf32>
    %c0_1 = arith.constant 0 : index
    %c0_2 = arith.constant 0 : index
    %1 = vector.load %arg2[%c0_1, %c0_2] : memref<8x128xf32, #tpu.memory_space<vmem>>, vector<8x128xf32>
    %c0_3 = arith.constant 0 : index
    %c0_4 = arith.constant 0 : index
    %2 = vector.load %arg4[%c0_3, %c0_4] : memref<4x128xf32, #tpu.memory_space<vmem>>, vector<4x128xf32>
    %c0_5 = arith.constant 0 : index
    %c0_6 = arith.constant 0 : index
    %c0_7 = arith.constant 0 : index
    %3 = vector.load %arg3[%c0_5, %c0_6, %c0_7] : memref<4x128x128xf32, #tpu.memory_space<vmem>>, vector<1x128x128xf32>
    %4 = vector.shape_cast %3 : vector<1x128x128xf32> to vector<128x128xf32>
    %cst = arith.constant dense<0.000000e+00> : vector<8x128xf32>
    %5 = tpu.matmul %0, %4, %cst {dimension_numbers = #tpu.dot_dimension_numbers<[1], [0], [0], [1], [0, 0, 1, 1], [], []>} : vector<8x128xf32>, vector<128x128xf32>, vector<8x128xf32> -> vector<8x128xf32>
    %6 = vector.extract_strided_slice %2 {offsets = [0, 0], sizes = [1, 128], strides = [1, 1]} : vector<4x128xf32> to vector<1x128xf32>
    %7 = vector.broadcast %6 : vector<1x128xf32> to vector<8x128xf32>
    %8 = arith.addf %5, %7 : vector<8x128xf32>
    %cst_8 = arith.constant 0.000000e+00 : f32
    %9 = vector.broadcast %cst_8 : f32 to vector<8x128xf32>
    %10 = arith.maximumf %8, %9 : vector<8x128xf32>
    %c1 = arith.constant 1 : index
    %c0_9 = arith.constant 0 : index
    %c0_10 = arith.constant 0 : index
    %11 = vector.load %arg3[%c1, %c0_9, %c0_10] : memref<4x128x128xf32, #tpu.memory_space<vmem>>, vector<1x128x128xf32>
    %12 = vector.shape_cast %11 : vector<1x128x128xf32> to vector<128x128xf32>
    %cst_11 = arith.constant dense<0.000000e+00> : vector<8x128xf32>
    %13 = tpu.matmul %1, %12, %cst_11 {dimension_numbers = #tpu.dot_dimension_numbers<[1], [0], [0], [1], [0, 0, 1, 1], [], []>} : vector<8x128xf32>, vector<128x128xf32>, vector<8x128xf32> -> vector<8x128xf32>
    %14 = vector.extract_strided_slice %2 {offsets = [1, 0], sizes = [1, 128], strides = [1, 1]} : vector<4x128xf32> to vector<1x128xf32>
    %15 = vector.broadcast %14 : vector<1x128xf32> to vector<8x128xf32>
    %16 = arith.addf %13, %15 : vector<8x128xf32>
    %cst_12 = arith.constant 0.000000e+00 : f32
    %17 = vector.broadcast %cst_12 : f32 to vector<8x128xf32>
    %18 = arith.maximumf %16, %17 : vector<8x128xf32>
    %c2 = arith.constant 2 : index
    %c0_13 = arith.constant 0 : index
    %c0_14 = arith.constant 0 : index
    %19 = vector.load %arg3[%c2, %c0_13, %c0_14] : memref<4x128x128xf32, #tpu.memory_space<vmem>>, vector<1x128x128xf32>
    %20 = vector.shape_cast %19 : vector<1x128x128xf32> to vector<128x128xf32>
    %cst_15 = arith.constant dense<0.000000e+00> : vector<8x128xf32>
    %21 = tpu.matmul %10, %20, %cst_15 {dimension_numbers = #tpu.dot_dimension_numbers<[1], [0], [0], [1], [0, 0, 1, 1], [], []>} : vector<8x128xf32>, vector<128x128xf32>, vector<8x128xf32> -> vector<8x128xf32>
    %22 = vector.extract_strided_slice %2 {offsets = [2, 0], sizes = [1, 128], strides = [1, 1]} : vector<4x128xf32> to vector<1x128xf32>
    %23 = vector.broadcast %22 : vector<1x128xf32> to vector<8x128xf32>
    %24 = arith.addf %21, %23 : vector<8x128xf32>
    %25 = arith.negf %24 : vector<8x128xf32>
    %26 = math.exp %25 : vector<8x128xf32>
    %cst_16 = arith.constant 1.000000e+00 : f32
    %27 = vector.broadcast %cst_16 : f32 to vector<8x128xf32>
    %28 = arith.addf %27, %26 : vector<8x128xf32>
    %29 = arith.divf %27, %28 : vector<8x128xf32>
    %c3 = arith.constant 3 : index
    %c0_17 = arith.constant 0 : index
    %c0_18 = arith.constant 0 : index
    %30 = vector.load %arg3[%c3, %c0_17, %c0_18] : memref<4x128x128xf32, #tpu.memory_space<vmem>>, vector<1x128x128xf32>
    %31 = vector.shape_cast %30 : vector<1x128x128xf32> to vector<128x128xf32>
    %cst_19 = arith.constant dense<0.000000e+00> : vector<8x128xf32>
    %32 = tpu.matmul %18, %31, %cst_19 {dimension_numbers = #tpu.dot_dimension_numbers<[1], [0], [0], [1], [0, 0, 1, 1], [], []>} : vector<8x128xf32>, vector<128x128xf32>, vector<8x128xf32> -> vector<8x128xf32>
    %33 = vector.extract_strided_slice %2 {offsets = [3, 0], sizes = [1, 128], strides = [1, 1]} : vector<4x128xf32> to vector<1x128xf32>
    %34 = vector.broadcast %33 : vector<1x128xf32> to vector<8x128xf32>
    %35 = arith.addf %32, %34 : vector<8x128xf32>
    %36 = arith.negf %35 : vector<8x128xf32>
    %37 = math.exp %36 : vector<8x128xf32>
    %cst_20 = arith.constant 1.000000e+00 : f32
    %38 = vector.broadcast %cst_20 : f32 to vector<8x128xf32>
    %39 = arith.addf %38, %37 : vector<8x128xf32>
    %40 = arith.divf %38, %39 : vector<8x128xf32>
    %41 = arith.mulf %29, %0 : vector<8x128xf32>
    %42 = arith.mulf %40, %1 : vector<8x128xf32>
    %43 = arith.addf %41, %42 : vector<8x128xf32>
    %c0_21 = arith.constant 0 : index
    %c0_22 = arith.constant 0 : index
    %44 = vector.load %arg5[%c0_21, %c0_22] : memref<8x128xf32, #tpu.memory_space<vmem>>, vector<8x128xf32>
    tpu.vector_store %arg5[%c0_21, %c0_22], %43 {strides = array<i32>} : memref<8x128xf32, #tpu.memory_space<vmem>>, vector<8x128xf32>,
    return
  }
  func.func @transform_0(%arg0: i32) -> (i32, i32) {
    %c0_i32 = arith.constant 0 : i32
    %c0_i32_0 = arith.constant 0 : i32
    return %arg0, %c0_i32 : i32, i32
  }
  func.func @transform_1(%arg0: i32) -> (i32, i32) {
    %c0_i32 = arith.constant 0 : i32
    %c0_i32_0 = arith.constant 0 : i32
    return %arg0, %c0_i32 : i32, i32
  }
  func.func @transform_2(%arg0: i32) -> (i32, i32, i32) {
    %c0_i32 = arith.constant 0 : i32
    %c0_i32_0 = arith.constant 0 : i32
    %c0_i32_1 = arith.constant 0 : i32
    %c0_i32_2 = arith.constant 0 : i32
    return %c0_i32, %c0_i32_0, %c0_i32_1 : i32, i32, i32
  }
  func.func @transform_3(%arg0: i32) -> (i32, i32) {
    %c0_i32 = arith.constant 0 : i32
    %c0_i32_0 = arith.constant 0 : i32
    %c0_i32_1 = arith.constant 0 : i32
    return %c0_i32, %c0_i32_0 : i32, i32
  }
  func.func @transform_4(%arg0: i32) -> (i32, i32) {
    %c0_i32 = arith.constant 0 : i32
    %c0_i32_0 = arith.constant 0 : i32
    return %arg0, %c0_i32 : i32, i32
  }
}

</mosaic_0001>

<llo_original>
// kernel: tpu_custom_call.1
$region0: #{tpu_custom_call.1}
  #allocation0 [shape = 'u32[]', space=smem, size = 0x4, offset = 0x4, fixed_abs, tag = 'smem constant byte address 0x4 - core index']
  #allocation1 [shape = 'u32[72,128]{1,0:T(1,128)}', space=vmem, size = 0x9000, scoped, tag = 'internal scratch']
  %s0 = inlined_call_operand.hbm [shape: f32[8,128], index: 0, kind: input, shape index: {}]
  %s1 = inlined_call_operand.hbm [shape: f32[8,128], index: 1, kind: input, shape index: {}]
  %s2 = inlined_call_operand.hbm [shape: f32[4,128,128], index: 2, kind: input, shape index: {}]
  %s3 = inlined_call_operand.hbm [shape: f32[4,128], index: 3, kind: input, shape index: {}]
  %s4 = inlined_call_operand.hbm [shape: f32[8,128], index: 4, kind: output, shape index: {}]
  %s5 = sld [smem:[#allocation0]]
  $region42: #{tpu_custom_call.1} parent=0
    _
  %s7 = ssub.s32 1, %s5
  %s8 = scalar_select 0, %s7, %s5
  $region1: #{tpu_custom_call.1} parent=0
    #allocation2 [shape = 'u8[4096]{0}', space=vmem, size = 0x1000, scoped, tag = 'input window, operand 0, single buffered']
    #allocation3 [shape = 's32[1]{0}', space=sflag, size = 0x4, scoped, tag = 'scoped memory for tpu_custom_call.1']
    #allocation4 [shape = 's32[1]{0}', space=sflag, size = 0x4, scoped, tag = 'scoped memory for tpu_custom_call.1']
    #allocation5 [shape = 'u8[4096]{0}', space=vmem, size = 0x1000, scoped, tag = 'input window, operand 1, single buffered']
    #allocation6 [shape = 's32[1]{0}', space=sflag, size = 0x4, scoped, tag = 'scoped memory for tpu_custom_call.1']
    #allocation7 [shape = 'u8[262144]{0}', space=vmem, size = 0x40000, scoped, tag = 'input window, operand 2, single buffered']
    #allocation8 [shape = 'u8[2048]{0}', space=vmem, size = 0x800, scoped, tag = 'input window, operand 3, single buffered']
    #allocation9 [shape = 's32[1]{0}', space=sflag, size = 0x4, scoped, tag = 'scoped memory for tpu_custom_call.1']
    #allocation10 [shape = 'u8[4096]{0}', space=vmem, size = 0x1000, scoped, tag = 'output window, operand 0, single buffered']
    %9 = vsyncpa [#allocation3], 0
    %10 = vsyncpa [#allocation6], 0
    %11 = vsyncpa [#allocation9], 0
    %12 = vsyncpa [#allocation4], 0
    // Predicated region
    $region2: #{tpu_custom_call.1} parent=1 // pred_check
      _
    $region3: #{tpu_custom_call.1} parent=1 // pred_check_branch
      %14 = sbr.rel (0) target = $region5
    $region4: #{tpu_custom_call.1} parent=1 // pred_region
      %16 = vsyncadd [#allocation3], 0
      %s18 = sshll.u32 %s0, 4
      %s19 = int_to_ptr.hbm [resolvable:$true] %s18
      %s20 = sshll.u32 [#allocation2], 4
      %s21 = int_to_ptr.vmem [resolvable:$true] %s20
      %23 = dma.hbm_to_vmem [thread:$0]  %s19, 128, %s21, [#allocation3]
    $region5: #{tpu_custom_call.1} parent=1 // pred_fallthru
      _
    // Predicated region
    $region6: #{tpu_custom_call.1} parent=1 // pred_check
      _
    $region7: #{tpu_custom_call.1} parent=1 // pred_check_branch
      %25 = sbr.rel (0) target = $region9
    $region8: #{tpu_custom_call.1} parent=1 // pred_region
      %27 = vsyncadd [#allocation6], 0
      %s29 = sshll.u32 %s1, 4
      %s30 = int_to_ptr.hbm [resolvable:$true] %s29
      %s31 = sshll.u32 [#allocation5], 4
      %s32 = int_to_ptr.vmem [resolvable:$true] %s31
      %34 = dma.hbm_to_vmem [thread:$0]  %s30, 128, %s32, [#allocation6]
    $region9: #{tpu_custom_call.1} parent=1 // pred_fallthru
      _
    // Predicated region
    $region10: #{tpu_custom_call.1} parent=1 // pred_check
      _
    $region11: #{tpu_custom_call.1} parent=1 // pred_check_branch
      %36 = sbr.rel (0) target = $region13
    $region12: #{tpu_custom_call.1} parent=1 // pred_region
      %38 = vsyncadd [#allocation6], 0
      %s39 = sshll.u32 %s2, 4
      %s40 = int_to_ptr.hbm [resolvable:$true] %s39
      %s41 = sshll.u32 [#allocation7], 4
      %s42 = int_to_ptr.vmem [resolvable:$true] %s41
      %47 = dma.hbm_to_vmem [thread:$0]  %s40, 8192, %s42, [#allocation6], 128, 128, 8
    $region13: #{tpu_custom_call.1} parent=1 // pred_fallthru
      _
    // Predicated region
    $region14: #{tpu_custom_call.1} parent=1 // pred_check
      _
    $region15: #{tpu_custom_call.1} parent=1 // pred_check_branch
      %49 = sbr.rel (0) target = $region17
    $region16: #{tpu_custom_call.1} parent=1 // pred_region
      %51 = vsyncadd [#allocation9], 0
      %s53 = sshll.u32 %s3, 4
      %s54 = int_to_ptr.hbm [resolvable:$true] %s53
      %s55 = sshll.u32 [#allocation8], 4
      %s56 = int_to_ptr.vmem [resolvable:$true] %s55
      %58 = dma.hbm_to_vmem [thread:$0]  %s54, 64, %s56, [#allocation9]
    $region17: #{tpu_custom_call.1} parent=1 // pred_fallthru
      _
    // Predicated region
    $region18: #{tpu_custom_call.1} parent=1 // pred_check
      _
    $region19: #{tpu_custom_call.1} parent=1 // pred_check_branch
      %60 = sbr.rel (0) target = $region21
    $region20: #{tpu_custom_call.1} parent=1 // pred_region
      %62 = dma.done [#allocation3], 128
    $region21: #{tpu_custom_call.1} parent=1 // pred_fallthru
      _
    // Predicated region
    $region22: #{tpu_custom_call.1} parent=1 // pred_check
      _
    $region23: #{tpu_custom_call.1} parent=1 // pred_check_branch
      %64 = sbr.rel (0) target = $region25
    $region24: #{tpu_custom_call.1} parent=1 // pred_region
      %66 = dma.done [#allocation6], 128
    $region25: #{tpu_custom_call.1} parent=1 // pred_fallthru
      _
    // Predicated region
    $region26: #{tpu_custom_call.1} parent=1 // pred_check
      _
    $region27: #{tpu_custom_call.1} parent=1 // pred_check_branch
      %68 = sbr.rel (0) target = $region29
    $region28: #{tpu_custom_call.1} parent=1 // pred_region
      %70 = dma.done [#allocation6], 8192
    $region29: #{tpu_custom_call.1} parent=1 // pred_fallthru
      _
    // Predicated region
    $region30: #{tpu_custom_call.1} parent=1 // pred_check
      _
    $region31: #{tpu_custom_call.1} parent=1 // pred_check_branch
      %72 = sbr.rel (0) target = $region33
    $region32: #{tpu_custom_call.1} parent=1 // pred_region
      %74 = dma.done [#allocation9], 64
    $region33: #{tpu_custom_call.1} parent=1 // pred_fallthru
      _
    %v75 = vld [vmem:[#allocation2] sm:$0xff]
    %v76 = vld [vmem:[#allocation5] sm:$0xff]
    %v77 = vld [vmem:[#allocation8] sm:$0xf]
    %v78 = vld [vmem:[#allocation7] sm:$0xff]
    %v79 = vld [vmem:[#allocation7 + $0x8] sm:$0xff]
    %v80 = vld [vmem:[#allocation7 + $0x10] sm:$0xff]
    %v81 = vld [vmem:[#allocation7 + $0x18] sm:$0xff]
    %v82 = vld [vmem:[#allocation7 + $0x20] sm:$0xff]
    %v83 = vld [vmem:[#allocation7 + $0x28] sm:$0xff]
    %v84 = vld [vmem:[#allocation7 + $0x30] sm:$0xff]
    %v85 = vld [vmem:[#allocation7 + $0x38] sm:$0xff]
    %v86 = vld [vmem:[#allocation7 + $0x40] sm:$0xff]
    %v87 = vld [vmem:[#allocation7 + $0x48] sm:$0xff]
    %v88 = vld [vmem:[#allocation7 + $0x50] sm:$0xff]
    %v89 = vld [vmem:[#allocation7 + $0x58] sm:$0xff]
    %v90 = vld [vmem:[#allocation7 + $0x60] sm:$0xff]
    %v91 = vld [vmem:[#allocation7 + $0x68] sm:$0xff]
    %v92 = vld [vmem:[#allocation7 + $0x70] sm:$0xff]
    %v93 = vld [vmem:[#allocation7 + $0x78] sm:$0xff]
    %v94 = vperm.slane %v77, 0
    %95 = vmatpush.msra.mxu0 %v93
    %96 = vmatpush.msra.mxu0 %v92
    %97 = vmatpush.msra.mxu0 %v91
    %98 = vmatpush.msra.mxu0 %v90
    %99 = vmatpush.msra.mxu0 %v89
    %100 = vmatpush.msra.mxu0 %v88
    %101 = vmatpush.msra.mxu0 %v87
    %102 = vmatpush.msra.mxu0 %v86
    %103 = vmatpush.msra.mxu0 %v85
    %104 = vmatpush.msra.mxu0 %v84
    %105 = vmatpush.msra.mxu0 %v83
    %106 = vmatpush.msra.mxu0 %v82
    %107 = vmatpush.msra.mxu0 %v81
    %108 = vmatpush.msra.mxu0 %v80
    %109 = vmatpush.msra.mxu0 %v79
    %110 = vmatpush.msra.mxu0 %v78
    %111 = vmatmul.f32.gmra.mxu0 %v75
    %v112 = vpop.f32.mrf.mxu0
    %v113 = vadd.f32 %v94, %v112
    %114 = vdwg.mxu0
    %v115 = vmax.f32 %v113, 0.0
    %s116 = scalar_lea.vmem [#allocation7], 128
    %v117 = vld [vmem:[%s116] sm:$0xff]
    %v118 = vld [vmem:[%s116 + $0x8] sm:$0xff]
    %v119 = vld [vmem:[%s116 + $0x10] sm:$0xff]
    %v120 = vld [vmem:[%s116 + $0x18] sm:$0xff]
    %v121 = vld [vmem:[%s116 + $0x20] sm:$0xff]
    %v122 = vld [vmem:[%s116 + $0x28] sm:$0xff]
    %v123 = vld [vmem:[%s116 + $0x30] sm:$0xff]
    %v124 = vld [vmem:[%s116 + $0x38] sm:$0xff]
    %v125 = vld [vmem:[%s116 + $0x40] sm:$0xff]
    %v126 = vld [vmem:[%s116 + $0x48] sm:$0xff]
    %v127 = vld [vmem:[%s116 + $0x50] sm:$0xff]
    %v128 = vld [vmem:[%s116 + $0x58] sm:$0xff]
    %v129 = vld [vmem:[%s116 + $0x60] sm:$0xff]
    %v130 = vld [vmem:[%s116 + $0x68] sm:$0xff]
    %v131 = vld [vmem:[%s116 + $0x70] sm:$0xff]
    %v132 = vld [vmem:[%s116 + $0x78] sm:$0xff]
    %v133 = vperm.slane %v77, 1
    %134 = vmatpush.msra.mxu0 %v132
    %135 = vmatpush.msra.mxu0 %v131
    %136 = vmatpush.msra.mxu0 %v130
    %137 = vmatpush.msra.mxu0 %v129
    %138 = vmatpush.msra.mxu0 %v128
    %139 = vmatpush.msra.mxu0 %v127
    %140 = vmatpush.msra.mxu0 %v126
    %141 = vmatpush.msra.mxu0 %v125
    %142 = vmatpush.msra.mxu0 %v124
    %143 = vmatpush.msra.mxu0 %v123
    %144 = vmatpush.msra.mxu0 %v122
    %145 = vmatpush.msra.mxu0 %v121
    %146 = vmatpush.msra.mxu0 %v120
    %147 = vmatpush.msra.mxu0 %v119
    %148 = vmatpush.msra.mxu0 %v118
    %149 = vmatpush.msra.mxu0 %v117
    %150 = vmatmul.f32.gmra.mxu0 %v76
    %v151 = vpop.f32.mrf.mxu0
    %v152 = vadd.f32 %v133, %v151
    %153 = vdwg.mxu0
    %v154 = vmax.f32 %v152, 0.0
    %s155 = scalar_lea.vmem [#allocation7], 256
    %v156 = vld [vmem:[%s155] sm:$0xff]
    %v157 = vld [vmem:[%s155 + $0x8] sm:$0xff]
    %v158 = vld [vmem:[%s155 + $0x10] sm:$0xff]
    %v159 = vld [vmem:[%s155 + $0x18] sm:$0xff]
    %v160 = vld [vmem:[%s155 + $0x20] sm:$0xff]
    %v161 = vld [vmem:[%s155 + $0x28] sm:$0xff]
    %v162 = vld [vmem:[%s155 + $0x30] sm:$0xff]
    %v163 = vld [vmem:[%s155 + $0x38] sm:$0xff]
    %v164 = vld [vmem:[%s155 + $0x40] sm:$0xff]
    %v165 = vld [vmem:[%s155 + $0x48] sm:$0xff]
    %v166 = vld [vmem:[%s155 + $0x50] sm:$0xff]
    %v167 = vld [vmem:[%s155 + $0x58] sm:$0xff]
    %v168 = vld [vmem:[%s155 + $0x60] sm:$0xff]
    %v169 = vld [vmem:[%s155 + $0x68] sm:$0xff]
    %v170 = vld [vmem:[%s155 + $0x70] sm:$0xff]
    %v171 = vld [vmem:[%s155 + $0x78] sm:$0xff]
    %v172 = vperm.slane %v77, 2
    %173 = vmatpush.msra.mxu0 %v171
    %174 = vmatpush.msra.mxu0 %v170
    %175 = vmatpush.msra.mxu0 %v169
    %176 = vmatpush.msra.mxu0 %v168
    %177 = vmatpush.msra.mxu0 %v167
    %178 = vmatpush.msra.mxu0 %v166
    %179 = vmatpush.msra.mxu0 %v165
    %180 = vmatpush.msra.mxu0 %v164
    %181 = vmatpush.msra.mxu0 %v163
    %182 = vmatpush.msra.mxu0 %v162
    %183 = vmatpush.msra.mxu0 %v161
    %184 = vmatpush.msra.mxu0 %v160
    %185 = vmatpush.msra.mxu0 %v159
    %186 = vmatpush.msra.mxu0 %v158
    %187 = vmatpush.msra.mxu0 %v157
    %188 = vmatpush.msra.mxu0 %v156
    %189 = vmatmul.f32.gmra.mxu0 %v115
    %v190 = vpop.f32.mrf.mxu0
    %v191 = vadd.f32 %v172, %v190
    %192 = vdwg.mxu0
    %v193 = vxor.u32 %v191, 2147483648
    %v194 = vmul.f32 %v193, 1.442695
    %v195 = vpow.pop %v194
    %v196 = vadd.f32 %v195, 1.0
    %v197 = vrcp.pop %v196
    %v198 = vmul.f32 %v196, %v197
    %v199 = vsub.f32 1.0, %v198
    %v200 = vmul.f32 %v197, %v199
    %v201 = vadd.f32 %v197, %v200
    %vm202 = vweird.f32 %v196
    %vm203 = vweird.f32 %v197
    %vm204 = vmor %vm202, %vm203
    %v205 = vsel %vm204, %v197, %v201
    %v206 = vand.u32 2147483647, %v196
    %vm207 = vcmp.eq.f32.partialorder %v206, 8.507059e+37
    %v208 = vand.u32 %v196, 2147483648
    %v209 = vor.u32 1.1754944e-38, %v208
    %v210 = vsel %vm207, %v209, %v205
    %v211 = vmul.f32 1.0, %v210
    %s212 = scalar_lea.vmem [#allocation7], 384
    %v213 = vld [vmem:[%s212] sm:$0xff]
    %v214 = vld [vmem:[%s212 + $0x8] sm:$0xff]
    %v215 = vld [vmem:[%s212 + $0x10] sm:$0xff]
    %v216 = vld [vmem:[%s212 + $0x18] sm:$0xff]
    %v217 = vld [vmem:[%s212 + $0x20] sm:$0xff]
    %v218 = vld [vmem:[%s212 + $0x28] sm:$0xff]
    %v219 = vld [vmem:[%s212 + $0x30] sm:$0xff]
    %v220 = vld [vmem:[%s212 + $0x38] sm:$0xff]
    %v221 = vld [vmem:[%s212 + $0x40] sm:$0xff]
    %v222 = vld [vmem:[%s212 + $0x48] sm:$0xff]
    %v223 = vld [vmem:[%s212 + $0x50] sm:$0xff]
    %v224 = vld [vmem:[%s212 + $0x58] sm:$0xff]
    %v225 = vld [vmem:[%s212 + $0x60] sm:$0xff]
    %v226 = vld [vmem:[%s212 + $0x68] sm:$0xff]
    %v227 = vld [vmem:[%s212 + $0x70] sm:$0xff]
    %v228 = vld [vmem:[%s212 + $0x78] sm:$0xff]
    %v229 = vperm.slane %v77, 3
    %230 = vmatpush.msra.mxu0 %v228
    %231 = vmatpush.msra.mxu0 %v227
    %232 = vmatpush.msra.mxu0 %v226
    %233 = vmatpush.msra.mxu0 %v225
    %234 = vmatpush.msra.mxu0 %v224
    %235 = vmatpush.msra.mxu0 %v223
    %236 = vmatpush.msra.mxu0 %v222
    %237 = vmatpush.msra.mxu0 %v221
    %238 = vmatpush.msra.mxu0 %v220
    %239 = vmatpush.msra.mxu0 %v219
    %240 = vmatpush.msra.mxu0 %v218
    %241 = vmatpush.msra.mxu0 %v217
    %242 = vmatpush.msra.mxu0 %v216
    %243 = vmatpush.msra.mxu0 %v215
    %244 = vmatpush.msra.mxu0 %v214
    %245 = vmatpush.msra.mxu0 %v213
    %246 = vmatmul.f32.gmra.mxu0 %v154
    %v247 = vpop.f32.mrf.mxu0
    %v248 = vadd.f32 %v229, %v247
    %249 = vdwg.mxu0
    %v250 = vxor.u32 %v248, 2147483648
    %v251 = vmul.f32 %v250, 1.442695
    %v252 = vpow.pop %v251
    %v253 = vadd.f32 %v252, 1.0
    %v254 = vrcp.pop %v253
    %v255 = vmul.f32 %v253, %v254
    %v256 = vsub.f32 1.0, %v255
    %v257 = vmul.f32 %v254, %v256
    %v258 = vadd.f32 %v254, %v257
    %vm259 = vweird.f32 %v253
    %vm260 = vweird.f32 %v254
    %vm261 = vmor %vm259, %vm260
    %v262 = vsel %vm261, %v254, %v258
    %v263 = vand.u32 2147483647, %v253
    %vm264 = vcmp.eq.f32.partialorder %v263, 8.507059e+37
    %v265 = vand.u32 %v253, 2147483648
    %v266 = vor.u32 1.1754944e-38, %v265
    %v267 = vsel %vm264, %v266, %v262
    %v268 = vmul.f32 1.0, %v267
    %v269 = vmul.f32 %v211, %v75
    %v270 = vmul.f32 %v268, %v76
    %v271 = vadd.f32 %v269, %v270
    %272 = vst [vmem:[#allocation10] sm:$0xff] %v271
    // Predicated region
    $region34: #{tpu_custom_call.1} parent=1 // pred_check
      _
    $region35: #{tpu_custom_call.1} parent=1 // pred_check_branch
      %274 = sbr.rel (0) target = $region37
    $region36: #{tpu_custom_call.1} parent=1 // pred_region
      %276 = vsyncadd [#allocation4], 0
      %s278 = sshll.u32 [#allocation10], 4
      %s279 = int_to_ptr.vmem [resolvable:$true] %s278
      %s280 = sshll.u32 %s4, 4
      %s281 = int_to_ptr.hbm [resolvable:$true] %s280
      %283 = dma.vmem_to_hbm [thread:$0]  %s279, 128, %s281, [#allocation4]
    $region37: #{tpu_custom_call.1} parent=1 // pred_fallthru
      _
    // Predicated region
    $region38: #{tpu_custom_call.1} parent=1 // pred_check
      _
    $region39: #{tpu_custom_call.1} parent=1 // pred_check_branch
      %285 = sbr.rel (0) target = $region41
    $region40: #{tpu_custom_call.1} parent=1 // pred_region
      %287 = dma.done [#allocation4], 128
    $region41: #{tpu_custom_call.1} parent=1 // pred_fallthru
      _
    %288 = vsyncpa [#allocation3], 1
    %289 = vsyncpa [#allocation6], 1
    %290 = vsyncpa [#allocation9], 1
    %291 = vsyncpa [#allocation4], 1

</llo_original>
